<compile_context>
chip_gen: v7x
topology: tpu7x:2x2x1
jax: 0.10.0
libtpu: 0.0.40
codegen_flags: <defaults>
</compile_context>

<pallas_src>
import functools

import jax
import jax.numpy as jnp
from jax.experimental import pallas as pl
from jax.experimental.pallas import tpu as pltpu

EPS = 1e-5


def _conv_bn_relu_kernel(w_ref, x_ref, gamma_ref, beta_ref, o_ref, *, inv_l):
    # w_ref:     (TC, CIN_P)   one Cout block of the (padded) 1x1-conv weight
    # x_ref:     (CIN_P, LP)   padded channels-major activations (zero-padded)
    # gamma_ref: (TC, 1)
    # beta_ref:  (TC, 1)
    # o_ref:     (TC, LP)      lane-dense padded output block
    y = jnp.dot(w_ref[...], x_ref[...], preferred_element_type=jnp.float32)

    # BatchNorm2d training-mode statistics over (N, H, W) == the lane axis.
    # Padded lanes of x are zero => padded lanes of y are zero, so sums over
    # the padded width equal sums over the true width; divide by the TRUE
    # length (inv_l = 1 / (N*H*W)), never the padded one.
    s = jnp.sum(y, axis=1, keepdims=True)          # (TC, 1)
    sq = jnp.sum(y * y, axis=1, keepdims=True)     # (TC, 1)
    mean = s * inv_l
    var = sq * inv_l - mean * mean                 # biased variance
    inv_std = jax.lax.rsqrt(var + EPS)

    # Fold the BN affine into one per-channel scale/shift -> single VPU pass.
    scale = gamma_ref[...] * inv_std               # (TC, 1)
    shift = beta_ref[...] - mean * scale           # (TC, 1)
    o_ref[...] = jnp.maximum(y * scale + shift, 0.0)


def _round_up(v, m):
    return ((v + m - 1) // m) * m


def conv_bn_relu(x_nchw, weight, gamma, beta):
    """x_nchw: (N, Cin, H, W) f32; weight: (Cout, Cin) f32 (1x1 conv kernel
    squeezed); gamma/beta: (Cout,) f32.  Returns (N, Cout, H, W) f32."""
    n, cin, h, w = x_nchw.shape
    cout = weight.shape[0]
    L = n * h * w

    TC = 128                                # Cout rows per grid step
    cout_p = _round_up(cout, TC)            # 244 -> 256
    cin_p = _round_up(cin, 128)             # 244 -> 256 (clean MXU K)
    l_p = _round_up(L, 128)                 # 196 -> 256 (lane-dense)

    # (N, Cin, H, W) -> (Cin, N*H*W).  For N == 1 this is a free reshape.
    # TODO(synk): for N > 1 accept a channels-major activation layout from the
    # caller to avoid an extra HBM transpose pass outside the kernel.
    x2d = jnp.transpose(x_nchw, (1, 0, 2, 3)).reshape(cin, L)

    # Zero-pad: padded Cin rows / padded lanes contribute 0 to the matmul and
    # to the BN sums; padded Cout rows are sliced away below.
    x2d_p = jnp.pad(x2d, ((0, cin_p - cin), (0, l_p - L)))
    w_p = jnp.pad(weight, ((0, cout_p - cout), (0, cin_p - cin)))
    gamma_p = jnp.pad(gamma, (0, cout_p - cout)).reshape(cout_p, 1)
    beta_p = jnp.pad(beta, (0, cout_p - cout)).reshape(cout_p, 1)

    kernel = functools.partial(_conv_bn_relu_kernel, inv_l=1.0 / float(L))

    cost = pl.CostEstimate(
        flops=2 * cout * cin * L + 4 * cout * L,
        transcendentals=cout,
        bytes_accessed=4 * (cin * L + cout * cin + cout * L + 2 * cout),
    )

    out2d_p = pl.pallas_call(
        kernel,
        out_shape=jax.ShapeDtypeStruct((cout_p, l_p), jnp.float32),
        grid=(cout_p // TC,),
        in_specs=[
            pl.BlockSpec((TC, cin_p), lambda i: (i, 0)),      # weight block
            pl.BlockSpec((cin_p, l_p), lambda i: (0, 0)),     # x, same block
            pl.BlockSpec((TC, 1), lambda i: (i, 0)),          # gamma block
            pl.BlockSpec((TC, 1), lambda i: (i, 0)),          # beta block
        ],
        out_specs=pl.BlockSpec((TC, l_p), lambda i: (i, 0)),
        compiler_params=pltpu.CompilerParams(
            dimension_semantics=("parallel",)),
        cost_estimate=cost,
    )(w_p, x2d_p, gamma_p, beta_p)

    # Slice padded channels/lanes back, then (Cout, N*H*W) -> (N, Cout, H, W).
    out2d = out2d_p[:cout, :L]
    return jnp.transpose(out2d.reshape(cout, n, h, w), (1, 0, 2, 3))


def _reference(x_nchw, weight, gamma, beta):
    # Pure-JAX reference: 1x1 conv + training-mode BN (biased var) + ReLU.
    y = jnp.einsum("oc,nchw->nohw", weight, x_nchw)
    mean = jnp.mean(y, axis=(0, 2, 3), keepdims=True)
    var = jnp.mean((y - mean) ** 2, axis=(0, 2, 3), keepdims=True)
    normed = (y - mean) * jax.lax.rsqrt(var + EPS)
    out = normed * gamma.reshape(1, -1, 1, 1) + beta.reshape(1, -1, 1, 1)
    return jnp.maximum(out, 0.0)


if __name__ == "__main__":
    # Shapes consistent with the module: Cin = Cout = 244 fixed by the conv
    # weight; batch/spatial match the original input (1, 244, 14, 14).
    N, C, H, W = 1, 244, 14, 14

    key = jax.random.PRNGKey(0)
    kx, kw, kg, kb = jax.random.split(key, 4)

    x = jax.random.normal(kx, (N, C, H, W), dtype=jnp.float32)
    # Conv2d weight (Cout, Cin, 1, 1) squeezed to (Cout, Cin), kaiming-like.
    weight = jax.random.uniform(kw, (C, C), dtype=jnp.float32,
                                minval=-1.0, maxval=1.0) / jnp.sqrt(float(C))
    gamma = jax.random.uniform(kg, (C,), dtype=jnp.float32, minval=0.5, maxval=1.5)
    beta = jax.random.uniform(kb, (C,), dtype=jnp.float32, minval=-0.5, maxval=0.5)

    out = jax.block_until_ready(conv_bn_relu(x, weight, gamma, beta))

    ref = jax.block_until_ready(_reference(x, weight, gamma, beta))
    assert out.shape == (N, C, H, W)
    assert jnp.allclose(out, ref, atol=1e-3, rtol=1e-3), "mismatch vs reference"

    print("KERNEL_OK")
</pallas_src>

<mosaic_0001>
module attributes {stable_mosaic.version = 11 : i64} {
  func.func @_conv_bn_relu_kernel(%arg0: i32, %arg1: memref<128x256xf32, #tpu.memory_space<vmem>>, %arg2: memref<256x256xf32, #tpu.memory_space<vmem>>, %arg3: memref<128x1xf32, #tpu.memory_space<vmem>>, %arg4: memref<128x1xf32, #tpu.memory_space<vmem>>, %arg5: memref<128x256xf32, #tpu.memory_space<vmem>>) attributes {dimension_semantics = [#tpu.dimension_semantics<parallel>], iteration_bounds = array<i64: 2>, scalar_prefetch = 0 : i64, scratch_operands = 0 : i64, tpu.core_type = #tpu.core_type<tc>, window_params = [{transform_indices = @transform_0, window_bounds = array<i64: 128, 256>}, {pipeline_mode = #tpu.pipeline_mode<synchronous>, transform_indices = @transform_1, window_bounds = array<i64: 256, 256>}, {transform_indices = @transform_2, window_bounds = array<i64: 128, 1>}, {transform_indices = @transform_3, window_bounds = array<i64: 128, 1>}, {transform_indices = @transform_4, window_bounds = array<i64: 128, 256>}]} {
    %c0 = arith.constant 0 : index
    %c0_0 = arith.constant 0 : index
    %0 = vector.load %arg1[%c0, %c0_0] : memref<128x256xf32, #tpu.memory_space<vmem>>, vector<128x256xf32>
    %c0_1 = arith.constant 0 : index
    %c0_2 = arith.constant 0 : index
    %1 = vector.load %arg2[%c0_1, %c0_2] : memref<256x256xf32, #tpu.memory_space<vmem>>, vector<256x256xf32>
    %cst = arith.constant dense<0.000000e+00> : vector<128x256xf32>
    %2 = tpu.matmul %0, %1, %cst {dimension_numbers = #tpu.dot_dimension_numbers<[1], [0], [0], [1], [0, 0, 1, 1], [], []>} : vector<128x256xf32>, vector<256x256xf32>, vector<128x256xf32> -> vector<128x256xf32>
    %cst_3 = arith.constant dense<0.000000e+00> : vector<128xf32>
    %3 = vector.multi_reduction <add>, %2, %cst_3 [1] : vector<128x256xf32> to vector<128xf32>
    %4 = vector.shape_cast %3 : vector<128xf32> to vector<128x1xf32>
    %5 = arith.mulf %2, %2 : vector<128x256xf32>
    %cst_4 = arith.constant dense<0.000000e+00> : vector<128xf32>
    %6 = vector.multi_reduction <add>, %5, %cst_4 [1] : vector<128x256xf32> to vector<128xf32>
    %7 = vector.shape_cast %6 : vector<128xf32> to vector<128x1xf32>
    %cst_5 = arith.constant 0.00510204071 : f32
    %8 = vector.broadcast %cst_5 : f32 to vector<128x1xf32>
    %9 = arith.mulf %4, %8 : vector<128x1xf32>
    %cst_6 = arith.constant 0.00510204071 : f32
    %10 = vector.broadcast %cst_6 : f32 to vector<128x1xf32>
    %11 = arith.mulf %7, %10 : vector<128x1xf32>
    %12 = arith.mulf %9, %9 : vector<128x1xf32>
    %13 = arith.subf %11, %12 : vector<128x1xf32>
    %cst_7 = arith.constant 9.99999974E-6 : f32
    %14 = vector.broadcast %cst_7 : f32 to vector<128x1xf32>
    %15 = arith.addf %13, %14 : vector<128x1xf32>
    %16 = math.rsqrt %15 : vector<128x1xf32>
    %c0_8 = arith.constant 0 : index
    %c0_9 = arith.constant 0 : index
    %17 = vector.load %arg3[%c0_8, %c0_9] : memref<128x1xf32, #tpu.memory_space<vmem>>, vector<128x1xf32>
    %18 = arith.mulf %17, %16 : vector<128x1xf32>
    %c0_10 = arith.constant 0 : index
    %c0_11 = arith.constant 0 : index
    %19 = vector.load %arg4[%c0_10, %c0_11] : memref<128x1xf32, #tpu.memory_space<vmem>>, vector<128x1xf32>
    %20 = arith.mulf %9, %18 : vector<128x1xf32>
    %21 = arith.subf %19, %20 : vector<128x1xf32>
    %22 = vector.broadcast %18 : vector<128x1xf32> to vector<128x256xf32>
    %23 = arith.mulf %2, %22 : vector<128x256xf32>
    %24 = vector.broadcast %21 : vector<128x1xf32> to vector<128x256xf32>
    %25 = arith.addf %23, %24 : vector<128x256xf32>
    %cst_12 = arith.constant 0.000000e+00 : f32
    %26 = vector.broadcast %cst_12 : f32 to vector<128x256xf32>
    %27 = arith.maximumf %25, %26 : vector<128x256xf32>
    %c0_13 = arith.constant 0 : index
    %c0_14 = arith.constant 0 : index
    %28 = vector.load %arg5[%c0_13, %c0_14] : memref<128x256xf32, #tpu.memory_space<vmem>>, vector<128x256xf32>
    tpu.vector_store %arg5[%c0_13, %c0_14], %27 {strides = array<i32>} : memref<128x256xf32, #tpu.memory_space<vmem>>, vector<128x256xf32>,
    return
  }
  func.func @transform_0(%arg0: i32) -> (i32, i32) {
    %c0_i32 = arith.constant 0 : i32
    %c0_i32_0 = arith.constant 0 : i32
    return %arg0, %c0_i32 : i32, i32
  }
  func.func @transform_1(%arg0: i32) -> (i32, i32) {
    %c0_i32 = arith.constant 0 : i32
    %c0_i32_0 = arith.constant 0 : i32
    %c0_i32_1 = arith.constant 0 : i32
    return %c0_i32, %c0_i32_0 : i32, i32
  }
  func.func @transform_2(%arg0: i32) -> (i32, i32) {
    %c0_i32 = arith.constant 0 : i32
    %c0_i32_0 = arith.constant 0 : i32
    return %arg0, %c0_i32 : i32, i32
  }
  func.func @transform_3(%arg0: i32) -> (i32, i32) {
    %c0_i32 = arith.constant 0 : i32
    %c0_i32_0 = arith.constant 0 : i32
    return %arg0, %c0_i32 : i32, i32
  }
  func.func @transform_4(%arg0: i32) -> (i32, i32) {
    %c0_i32 = arith.constant 0 : i32
    %c0_i32_0 = arith.constant 0 : i32
    return %arg0, %c0_i32 : i32, i32
  }
}

</mosaic_0001>

<llo_original>
// kernel: tpu_custom_call.1
$region0: #{tpu_custom_call.1}
  #allocation0 [shape = 'u32[]', space=smem, size = 0x4, offset = 0x4, fixed_abs, tag = 'smem constant byte address 0x4 - core index']
  #allocation1 [shape = 'u32[144,128]{1,0:T(1,128)}', space=vmem, size = 0x12000, scoped, tag = 'internal scratch']
  %s0 = inlined_call_operand.vmem [shape: f32[256,256], index: 0, kind: input, shape index: {}]
  %s1 = inlined_call_operand.hbm [shape: f32[256,256], index: 1, kind: input, shape index: {}]
  %s2 = inlined_call_operand.vmem [shape: f32[256,1], index: 2, kind: input, shape index: {}]
  %s3 = inlined_call_operand.vmem [shape: f32[256,1], index: 3, kind: input, shape index: {}]
  %s4 = inlined_call_operand.hbm [shape: f32[256,256], index: 4, kind: output, shape index: {}]
  %s5 = sld [smem:[#allocation0]]
  $region53: #{tpu_custom_call.1} parent=0
    _
  %s7 = ssub.s32 1, %s5
  %s8 = scalar_select 0, %s7, %s5
  $region1: #{tpu_custom_call.1} parent=0
    #allocation2 [shape = 'u8[262144]{0}', space=vmem, size = 0x40000, scoped, tag = 'input window, operand 1, single buffered']
    #allocation3 [shape = 's32[2]{0}', space=sflag, size = 0x8, scoped, tag = 'scoped memory for tpu_custom_call.1']
    #allocation4 [shape = 's32[2]{0}', space=sflag, size = 0x8, scoped, tag = 'scoped memory for tpu_custom_call.1']
    #allocation5 [shape = 'u8[262144]{0}', space=vmem, size = 0x40000, scoped, tag = 'output window, operand 0']
    %9 = vsyncpa [#allocation3], 0
    %10 = vsyncpa [#allocation4], 0
    %s11 = scalar_lea.sflag [#allocation4], 1
    %12 = vsyncpa %s11, 0
    loop: start=0, step=1, limit=4
    $region2: #{tpu_custom_call.1} parent=1 // loop_pre_header
      _
    $region3: #{tpu_custom_call.1} parent=1 // loop_header
      %s14 = sphi 0, %s18
      %p15 = scmp.ge.s32.totalorder %s14, 4
      %s24 = sphi 0, %s26
      %s27 = sphi 0, %s24
      %s28 = sphi 0, %s27
      %s44 = sphi 0, %s28
      %s48 = sphi 0, %s48
      %s50 = sphi 0, %s48
      %s51 = sphi 0, %s50
      %s65 = sphi 0, %s51
      %s71 = sphi 0, %s73
      %s74 = sphi 0, %s71
      %s75 = sphi 0, %s74
      %s91 = sphi 0, %s75
      %s97 = sphi 0, %s99
      %s100 = sphi 0, %s97
      %s101 = sphi 0, %s100
      %s117 = sphi 0, %s101
      %s123 = sphi 0, %s125
      %s126 = sphi 0, %s123
      %s127 = sphi 0, %s126
      %s143 = sphi 0, %s127
    $region4: #{tpu_custom_call.1} parent=1 // loop_header_branch
      %17 = sbr.rel (%p15) target = $region8
    $region5: #{tpu_custom_call.1} parent=1 // loop_body
      %s19 = ssub.s32 %s14, 1
      %s20 = ssub.s32 %s14, 2
      %s21 = sadd.s32 %s14, 1
      %s22 = ssub.s32 %s14, %s21
      %p23 = scmp.eq.s32.totalorder %s22, 0
      %s25 = sadd.s32 %s24, 1
      %s26 = scalar_select %p23, %s24, %s25
      %p29 = pneg %p23
      %p30 = scmp.eq.s32.totalorder %s14, 1
      %p31 = por %p29, %p30
      %p32 = scmp.ne.s32.totalorder %s24, %s27
      %p33 = scmp.eq.s32.totalorder %s14, 0
      %p34 = por %p32, %p33
      %p35 = scmp.ne.s32.totalorder %s24, %s27
      %p36 = scmp.eq.s32.totalorder %s19, 1
      %p37 = por %p35, %p36
      %p38 = scmp.ne.s32.totalorder %s27, %s28
      %p39 = scmp.eq.s32.totalorder %s19, 0
      %p40 = por %p38, %p39
      %p41 = scmp.ne.s32.totalorder %s27, %s28
      %p42 = scmp.eq.s32.totalorder %s20, 1
      %p43 = por %p41, %p42
      %p45 = scmp.ne.s32.totalorder %s28, %s44
      %p46 = scmp.eq.s32.totalorder %s20, 0
      %p47 = por %p45, %p46
      %s49 = sadd.s32 %s48, 1
      %p52 = scmp.eq.s32.totalorder %s14, 1
      %p53 = scmp.ne.s32.totalorder %s48, %s50
      %p54 = scmp.eq.s32.totalorder %s14, 0
      %p55 = por %p53, %p54
      %p56 = scmp.ne.s32.totalorder %s48, %s50
      %p57 = scmp.eq.s32.totalorder %s19, 1
      %p58 = por %p56, %p57
      %p59 = scmp.ne.s32.totalorder %s50, %s51
      %p60 = scmp.eq.s32.totalorder %s19, 0
      %p61 = por %p59, %p60
      %p62 = scmp.ne.s32.totalorder %s50, %s51
      %p63 = scmp.eq.s32.totalorder %s20, 1
      %p64 = por %p62, %p63
      %p66 = scmp.ne.s32.totalorder %s51, %s65
      %p67 = scmp.eq.s32.totalorder %s20, 0
      %p68 = por %p66, %p67
      %s69 = ssub.s32 %s14, %s21
      %p70 = scmp.eq.s32.totalorder %s69, 0
      %s72 = sadd.s32 %s71, 1
      %s73 = scalar_select %p70, %s71, %s72
      %p76 = pneg %p70
      %p77 = scmp.eq.s32.totalorder %s14, 1
      %p78 = por %p76, %p77
      %p79 = scmp.ne.s32.totalorder %s71, %s74
      %p80 = scmp.eq.s32.totalorder %s14, 0
      %p81 = por %p79, %p80
      %p82 = scmp.ne.s32.totalorder %s71, %s74
      %p83 = scmp.eq.s32.totalorder %s19, 1
      %p84 = por %p82, %p83
      %p85 = scmp.ne.s32.totalorder %s74, %s75
      %p86 = scmp.eq.s32.totalorder %s19, 0
      %p87 = por %p85, %p86
      %p88 = scmp.ne.s32.totalorder %s74, %s75
      %p89 = scmp.eq.s32.totalorder %s20, 1
      %p90 = por %p88, %p89
      %p92 = scmp.ne.s32.totalorder %s75, %s91
      %p93 = scmp.eq.s32.totalorder %s20, 0
      %p94 = por %p92, %p93
      %s95 = ssub.s32 %s14, %s21
      %p96 = scmp.eq.s32.totalorder %s95, 0
      %s98 = sadd.s32 %s97, 1
      %s99 = scalar_select %p96, %s97, %s98
      %p102 = pneg %p96
      %p103 = scmp.eq.s32.totalorder %s14, 1
      %p104 = por %p102, %p103
      %p105 = scmp.ne.s32.totalorder %s97, %s100
      %p106 = scmp.eq.s32.totalorder %s14, 0
      %p107 = por %p105, %p106
      %p108 = scmp.ne.s32.totalorder %s97, %s100
      %p109 = scmp.eq.s32.totalorder %s19, 1
      %p110 = por %p108, %p109
      %p111 = scmp.ne.s32.totalorder %s100, %s101
      %p112 = scmp.eq.s32.totalorder %s19, 0
      %p113 = por %p111, %p112
      %p114 = scmp.ne.s32.totalorder %s100, %s101
      %p115 = scmp.eq.s32.totalorder %s20, 1
      %p116 = por %p114, %p115
      %p118 = scmp.ne.s32.totalorder %s101, %s117
      %p119 = scmp.eq.s32.totalorder %s20, 0
      %p120 = por %p118, %p119
      %s121 = ssub.s32 %s14, %s21
      %p122 = scmp.eq.s32.totalorder %s121, 0
      %s124 = sadd.s32 %s123, 1
      %s125 = scalar_select %p122, %s123, %s124
      %p128 = pneg %p122
      %p129 = scmp.eq.s32.totalorder %s14, 1
      %p130 = por %p128, %p129
      %p131 = scmp.ne.s32.totalorder %s123, %s126
      %p132 = scmp.eq.s32.totalorder %s14, 0
      %p133 = por %p131, %p132
      %p134 = scmp.ne.s32.totalorder %s123, %s126
      %p135 = scmp.eq.s32.totalorder %s19, 1
      %p136 = por %p134, %p135
      %p137 = scmp.ne.s32.totalorder %s126, %s127
      %p138 = scmp.eq.s32.totalorder %s19, 0
      %p139 = por %p137, %p138
      %p140 = scmp.ne.s32.totalorder %s126, %s127
      %p141 = scmp.eq.s32.totalorder %s20, 1
      %p142 = por %p140, %p141
      %p144 = scmp.ne.s32.totalorder %s127, %s143
      %p145 = scmp.eq.s32.totalorder %s20, 0
      %p146 = por %p144, %p145
      %p147 = scmp.le.s32.totalorder 1, %s14
      %p148 = scmp.lt.s32.totalorder %s14, 3
      %p149 = pnand %p147, %p148
      %p150 = pneg %p149
      // Predicated region
      $region9: #{tpu_custom_call.1} parent=5 // pred_check
        _
      $region10: #{tpu_custom_call.1} parent=5 // pred_check_branch
        %152 = sbr.rel (%p149) target = $region12
      $region11: #{tpu_custom_call.1} parent=5 // pred_region
        %s153 = ssub.s32 %s14, 1
        // Predicated region
        $region13: #{tpu_custom_call.1} parent=11 // pred_check
          %p154 = pneg %p61
        $region14: #{tpu_custom_call.1} parent=11 // pred_check_branch
          %156 = sbr.rel (%p154) target = $region16
        $region15: #{tpu_custom_call.1} parent=11 // pred_region
          %s158 = ssub.s32 8192, 8192
          %159 = vsyncadd [#allocation3], %s158
          %s160 = sshll.u32 [#allocation2], 4
          %s161 = int_to_ptr.vmem [resolvable:$true] %s160
          %166 = dma.hbm_to_vmem [thread:$0]  %s1, 8192, %s161, [#allocation3], 256, 256, 16
        $region16: #{tpu_custom_call.1} parent=11 // pred_fallthru
          _
      $region12: #{tpu_custom_call.1} parent=5 // pred_fallthru
        _
      %p167 = scmp.lt.s32.totalorder %s14, 2
      // Predicated region
      $region17: #{tpu_custom_call.1} parent=5 // pred_check
        %p168 = pneg %p167
      $region18: #{tpu_custom_call.1} parent=5 // pred_check_branch
        %170 = sbr.rel (%p168) target = $region20
      $region19: #{tpu_custom_call.1} parent=5 // pred_region
        // Predicated region
        $region21: #{tpu_custom_call.1} parent=19 // pred_check
          %p171 = pneg %p34
        $region22: #{tpu_custom_call.1} parent=19 // pred_check_branch
          %173 = sbr.rel (%p171) target = $region24
        $region23: #{tpu_custom_call.1} parent=19 // pred_region
          %s174 = smul.u32 16, %s14
          %p175 = scmp.lt.s32.totalorder %s174, 31
          %s176 = scalar_select %p175, %s174, 31
          %s177 = smul.addr %s176, 2
          %s178 = smul.addr %s177, 8
          %s179 = scalar_lea.vmem %s0, %s178
          %s180 = smul.u32 16, %s14
        $region24: #{tpu_custom_call.1} parent=19 // pred_fallthru
          _
        // Predicated region
        $region25: #{tpu_custom_call.1} parent=19 // pred_check
          %p181 = pneg %p81
        $region26: #{tpu_custom_call.1} parent=19 // pred_check_branch
          %183 = sbr.rel (%p181) target = $region28
        $region27: #{tpu_custom_call.1} parent=19 // pred_region
          %s184 = smul.u32 16, %s14
          %p185 = scmp.lt.s32.totalorder %s184, 31
          %s186 = scalar_select %p185, %s184, 31
          %s187 = smul.addr %s186, 8
          %s188 = scalar_lea.vmem %s2, %s187
          %s189 = smul.u32 16, %s14
        $region28: #{tpu_custom_call.1} parent=19 // pred_fallthru
          _
        // Predicated region
        $region29: #{tpu_custom_call.1} parent=19 // pred_check
          %p190 = pneg %p107
        $region30: #{tpu_custom_call.1} parent=19 // pred_check_branch
          %192 = sbr.rel (%p190) target = $region32
        $region31: #{tpu_custom_call.1} parent=19 // pred_region
          %s193 = smul.u32 16, %s14
          %p194 = scmp.lt.s32.totalorder %s193, 31
          %s195 = scalar_select %p194, %s193, 31
          %s196 = smul.addr %s195, 8
          %s197 = scalar_lea.vmem %s3, %s196
          %s198 = smul.u32 16, %s14
        $region32: #{tpu_custom_call.1} parent=19 // pred_fallthru
          _
      $region20: #{tpu_custom_call.1} parent=5 // pred_fallthru
        _
      %p199 = scmp.le.s32.totalorder 1, %s14
      %p200 = scmp.lt.s32.totalorder %s14, 3
      %p201 = pnand %p199, %p200
      %p202 = pneg %p201
      // Predicated region
      $region33: #{tpu_custom_call.1} parent=5 // pred_check
        _
      $region34: #{tpu_custom_call.1} parent=5 // pred_check_branch
        %204 = sbr.rel (%p201) target = $region36
      $region35: #{tpu_custom_call.1} parent=5 // pred_region
        %s205 = ssub.s32 %s14, 1
        // Predicated region
        $region37: #{tpu_custom_call.1} parent=35 // pred_check
          %p206 = pneg %p61
        $region38: #{tpu_custom_call.1} parent=35 // pred_check_branch
          %208 = sbr.rel (%p206) target = $region40
        $region39: #{tpu_custom_call.1} parent=35 // pred_region
          %209 = dma.done [#allocation3], 8192
        $region40: #{tpu_custom_call.1} parent=35 // pred_fallthru
          _
        %s210 = smul.u32 16, %s19
        %p211 = scmp.lt.s32.totalorder %s210, 31
        %s212 = scalar_select %p211, %s210, 31
        %s213 = smul.addr %s212, 2
        %s214 = smul.addr %s213, 8
        %s215 = scalar_lea.vmem %s0, %s214
        %p216 = pneg %p40
        %p217 = pneg %p37
        %p218 = pneg %p61
        %p219 = pneg %p58
        %s220 = smul.u32 16, %s19
        %p221 = scmp.lt.s32.totalorder %s220, 31
        %s222 = scalar_select %p221, %s220, 31
        %s223 = smul.addr %s222, 8
        %s224 = scalar_lea.vmem %s2, %s223
        %p225 = pneg %p87
        %p226 = pneg %p84
        %s227 = smul.u32 16, %s19
        %p228 = scmp.lt.s32.totalorder %s227, 31
        %s229 = scalar_select %p228, %s227, 31
        %s230 = smul.addr %s229, 8
        %s231 = scalar_lea.vmem %s3, %s230
        %p232 = pneg %p113
        %p233 = pneg %p110
        %p234 = pneg %p139
        %p235 = pneg %p136
        %s236 = sand.u32 %s126, 1
        %s237 = scalar_lea.sflag [#allocation4], %s236
        %s238 = sand.u32 %s126, 1
        %s239 = smul.addr %s238, 256
        %s240 = scalar_lea.vmem [#allocation5], %s239
        %s241 = smul.u32 16, %s19
        %p242 = scmp.lt.s32.totalorder %s241, 31
        %s243 = scalar_select %p242, %s241, 31
        %s244 = smul.addr %s243, 2
        %s245 = smul.addr %s244, 8
        %s246 = scalar_lea.vmem %s0, %s245
        %s247 = smul.u32 16, %s19
        %s248 = smul.u32 16, %s19
        %p249 = scmp.lt.s32.totalorder %s248, 31
        %s250 = scalar_select %p249, %s248, 31
        %s251 = smul.addr %s250, 8
        %s252 = scalar_lea.vmem %s2, %s251
        %s253 = smul.u32 16, %s19
        %s254 = smul.u32 16, %s19
        %p255 = scmp.lt.s32.totalorder %s254, 31
        %s256 = scalar_select %p255, %s254, 31
        %s257 = smul.addr %s256, 8
        %s258 = scalar_lea.vmem %s3, %s257
        %s259 = smul.u32 16, %s19
        %s260 = smul.u32 16, %s19
        %v261 = vld [vmem:[%s246] sm:$0xff]
        %v262 = vld [vmem:[%s246 + $0x8] sm:$0xff]
        %v263 = vld [vmem:[%s246 + $0x10] sm:$0xff]
        %v264 = vld [vmem:[%s246 + $0x18] sm:$0xff]
        %v265 = vld [vmem:[%s246 + $0x20] sm:$0xff]
        %v266 = vld [vmem:[%s246 + $0x28] sm:$0xff]
        %v267 = vld [vmem:[%s246 + $0x30] sm:$0xff]
        %v268 = vld [vmem:[%s246 + $0x38] sm:$0xff]
        %v269 = vld [vmem:[%s246 + $0x40] sm:$0xff]
        %v270 = vld [vmem:[%s246 + $0x48] sm:$0xff]
        %v271 = vld [vmem:[%s246 + $0x50] sm:$0xff]
        %v272 = vld [vmem:[%s246 + $0x58] sm:$0xff]
        %v273 = vld [vmem:[%s246 + $0x60] sm:$0xff]
        %v274 = vld [vmem:[%s246 + $0x68] sm:$0xff]
        %v275 = vld [vmem:[%s246 + $0x70] sm:$0xff]
        %v276 = vld [vmem:[%s246 + $0x78] sm:$0xff]
        %v277 = vld [vmem:[%s246 + $0x80] sm:$0xff]
        %v278 = vld [vmem:[%s246 + $0x88] sm:$0xff]
        %v279 = vld [vmem:[%s246 + $0x90] sm:$0xff]
        %v280 = vld [vmem:[%s246 + $0x98] sm:$0xff]
        %v281 = vld [vmem:[%s246 + $0xa0] sm:$0xff]
        %v282 = vld [vmem:[%s246 + $0xa8] sm:$0xff]
        %v283 = vld [vmem:[%s246 + $0xb0] sm:$0xff]
        %v284 = vld [vmem:[%s246 + $0xb8] sm:$0xff]
        %v285 = vld [vmem:[%s246 + $0xc0] sm:$0xff]
        %v286 = vld [vmem:[%s246 + $0xc8] sm:$0xff]
        %v287 = vld [vmem:[%s246 + $0xd0] sm:$0xff]
        %v288 = vld [vmem:[%s246 + $0xd8] sm:$0xff]
        %v289 = vld [vmem:[%s246 + $0xe0] sm:$0xff]
        %v290 = vld [vmem:[%s246 + $0xe8] sm:$0xff]
        %v291 = vld [vmem:[%s246 + $0xf0] sm:$0xff]
        %v292 = vld [vmem:[%s246 + $0xf8] sm:$0xff]
        %v293 = vld [vmem:[#allocation2] sm:$0xff]
        %v294 = vld [vmem:[#allocation2 + $0x8] sm:$0xff]
        %v295 = vld [vmem:[#allocation2 + $0x10] sm:$0xff]
        %v296 = vld [vmem:[#allocation2 + $0x18] sm:$0xff]
        %v297 = vld [vmem:[#allocation2 + $0x20] sm:$0xff]
        %v298 = vld [vmem:[#allocation2 + $0x28] sm:$0xff]
        %v299 = vld [vmem:[#allocation2 + $0x30] sm:$0xff]
        %v300 = vld [vmem:[#allocation2 + $0x38] sm:$0xff]
        %v301 = vld [vmem:[#allocation2 + $0x40] sm:$0xff]
        %v302 = vld [vmem:[#allocation2 + $0x48] sm:$0xff]
        %v303 = vld [vmem:[#allocation2 + $0x50] sm:$0xff]
        %v304 = vld [vmem:[#allocation2 + $0x58] sm:$0xff]
        %v305 = vld [vmem:[#allocation2 + $0x60] sm:$0xff]
        %v306 = vld [vmem:[#allocation2 + $0x68] sm:$0xff]
        %v307 = vld [vmem:[#allocation2 + $0x70] sm:$0xff]
        %v308 = vld [vmem:[#allocation2 + $0x78] sm:$0xff]
        %v309 = vld [vmem:[#allocation2 + $0x80] sm:$0xff]
        %v310 = vld [vmem:[#allocation2 + $0x88] sm:$0xff]
        %v311 = vld [vmem:[#allocation2 + $0x90] sm:$0xff]
        %v312 = vld [vmem:[#allocation2 + $0x98] sm:$0xff]
        %v313 = vld [vmem:[#allocation2 + $0xa0] sm:$0xff]
        %v314 = vld [vmem:[#allocation2 + $0xa8] sm:$0xff]
        %v315 = vld [vmem:[#allocation2 + $0xb0] sm:$0xff]
        %v316 = vld [vmem:[#allocation2 + $0xb8] sm:$0xff]
        %v317 = vld [vmem:[#allocation2 + $0xc0] sm:$0xff]
        %v318 = vld [vmem:[#allocation2 + $0xc8] sm:$0xff]
        %v319 = vld [vmem:[#allocation2 + $0xd0] sm:$0xff]
        %v320 = vld [vmem:[#allocation2 + $0xd8] sm:$0xff]
        %v321 = vld [vmem:[#allocation2 + $0xe0] sm:$0xff]
        %v322 = vld [vmem:[#allocation2 + $0xe8] sm:$0xff]
        %v323 = vld [vmem:[#allocation2 + $0xf0] sm:$0xff]
        %v324 = vld [vmem:[#allocation2 + $0xf8] sm:$0xff]
        %v325 = vld [vmem:[#allocation2 + $0x100] sm:$0xff]
        %v326 = vld [vmem:[#allocation2 + $0x108] sm:$0xff]
        %v327 = vld [vmem:[#allocation2 + $0x110] sm:$0xff]
        %v328 = vld [vmem:[#allocation2 + $0x118] sm:$0xff]
        %v329 = vld [vmem:[#allocation2 + $0x120] sm:$0xff]
        %v330 = vld [vmem:[#allocation2 + $0x128] sm:$0xff]
        %v331 = vld [vmem:[#allocation2 + $0x130] sm:$0xff]
        %v332 = vld [vmem:[#allocation2 + $0x138] sm:$0xff]
        %v333 = vld [vmem:[#allocation2 + $0x140] sm:$0xff]
        %v334 = vld [vmem:[#allocation2 + $0x148] sm:$0xff]
        %v335 = vld [vmem:[#allocation2 + $0x150] sm:$0xff]
        %v336 = vld [vmem:[#allocation2 + $0x158] sm:$0xff]
        %v337 = vld [vmem:[#allocation2 + $0x160] sm:$0xff]
        %v338 = vld [vmem:[#allocation2 + $0x168] sm:$0xff]
        %v339 = vld [vmem:[#allocation2 + $0x170] sm:$0xff]
        %v340 = vld [vmem:[#allocation2 + $0x178] sm:$0xff]
        %v341 = vld [vmem:[#allocation2 + $0x180] sm:$0xff]
        %v342 = vld [vmem:[#allocation2 + $0x188] sm:$0xff]
        %v343 = vld [vmem:[#allocation2 + $0x190] sm:$0xff]
        %v344 = vld [vmem:[#allocation2 + $0x198] sm:$0xff]
        %v345 = vld [vmem:[#allocation2 + $0x1a0] sm:$0xff]
        %v346 = vld [vmem:[#allocation2 + $0x1a8] sm:$0xff]
        %v347 = vld [vmem:[#allocation2 + $0x1b0] sm:$0xff]
        %v348 = vld [vmem:[#allocation2 + $0x1b8] sm:$0xff]
        %v349 = vld [vmem:[#allocation2 + $0x1c0] sm:$0xff]
        %v350 = vld [vmem:[#allocation2 + $0x1c8] sm:$0xff]
        %v351 = vld [vmem:[#allocation2 + $0x1d0] sm:$0xff]
        %v352 = vld [vmem:[#allocation2 + $0x1d8] sm:$0xff]
        %v353 = vld [vmem:[#allocation2 + $0x1e0] sm:$0xff]
        %v354 = vld [vmem:[#allocation2 + $0x1e8] sm:$0xff]
        %v355 = vld [vmem:[#allocation2 + $0x1f0] sm:$0xff]
        %v356 = vld [vmem:[#allocation2 + $0x1f8] sm:$0xff]
        %357 = vmatprep.subr.mxu0 %v294
        %358 = vmatpush1.msra.mxu0 %v293
        %359 = vmatprep.subr.mxu0 %v296
        %360 = vmatpush1.msra.mxu0 %v295
        %361 = vmatprep.subr.mxu0 %v298
        %362 = vmatpush1.msra.mxu0 %v297
        %363 = vmatprep.subr.mxu0 %v300
        %364 = vmatpush1.msra.mxu0 %v299
        %365 = vmatprep.subr.mxu0 %v302
        %366 = vmatpush1.msra.mxu0 %v301
        %367 = vmatprep.subr.mxu0 %v304
        %368 = vmatpush1.msra.mxu0 %v303
        %369 = vmatprep.subr.mxu0 %v306
        %370 = vmatpush1.msra.mxu0 %v305
        %371 = vmatprep.subr.mxu0 %v308
        %372 = vmatpush1.msra.mxu0 %v307
        %373 = vmatprep.subr.mxu0 %v310
        %374 = vmatpush1.msra.mxu0 %v309
        %375 = vmatprep.subr.mxu0 %v312
        %376 = vmatpush1.msra.mxu0 %v311
        %377 = vmatprep.subr.mxu0 %v314
        %378 = vmatpush1.msra.mxu0 %v313
        %379 = vmatprep.subr.mxu0 %v316
        %380 = vmatpush1.msra.mxu0 %v315
        %381 = vmatprep.subr.mxu0 %v318
        %382 = vmatpush1.msra.mxu0 %v317
        %383 = vmatprep.subr.mxu0 %v320
        %384 = vmatpush1.msra.mxu0 %v319
        %385 = vmatprep.subr.mxu0 %v322
        %386 = vmatpush1.msra.mxu0 %v321
        %387 = vmatprep.subr.mxu0 %v324
        %388 = vmatpush1.msra.mxu0 %v323
        %389 = vmatprep.subr.mxu0 %v326
        %390 = vmatpush1.msra.mxu0 %v325
        %391 = vmatprep.subr.mxu0 %v328
        %392 = vmatpush1.msra.mxu0 %v327
        %393 = vmatprep.subr.mxu0 %v330
        %394 = vmatpush1.msra.mxu0 %v329
        %395 = vmatprep.subr.mxu0 %v332
        %396 = vmatpush1.msra.mxu0 %v331
        %397 = vmatprep.subr.mxu0 %v334
        %398 = vmatpush1.msra.mxu0 %v333
        %399 = vmatprep.subr.mxu0 %v336
        %400 = vmatpush1.msra.mxu0 %v335
        %401 = vmatprep.subr.mxu0 %v338
        %402 = vmatpush1.msra.mxu0 %v337
        %403 = vmatprep.subr.mxu0 %v340
        %404 = vmatpush1.msra.mxu0 %v339
        %405 = vmatprep.subr.mxu0 %v342
        %406 = vmatpush1.msra.mxu0 %v341
        %407 = vmatprep.subr.mxu0 %v344
        %408 = vmatpush1.msra.mxu0 %v343
        %409 = vmatprep.subr.mxu0 %v346
        %410 = vmatpush1.msra.mxu0 %v345
        %411 = vmatprep.subr.mxu0 %v348
        %412 = vmatpush1.msra.mxu0 %v347
        %413 = vmatprep.subr.mxu0 %v350
        %414 = vmatpush1.msra.mxu0 %v349
        %415 = vmatprep.subr.mxu0 %v352
        %416 = vmatpush1.msra.mxu0 %v351
        %417 = vmatprep.subr.mxu0 %v354
        %418 = vmatpush1.msra.mxu0 %v353
        %419 = vmatprep.subr.mxu0 %v356
        %420 = vmatpush1.msra.mxu0 %v355
        %421 = vmatprep.mubr.f32.mxu0 %v262
        %422 = vmatmul.mubr.f32.gmra.mrb[0].mxu0 %v261
        %v423 = vpop.f32.mrb[0].mxu0
        %v424 = vadd.f32 0.0, %v423
        %v425 = vpop.f32.mrb[0].mxu0
        %v426 = vadd.f32 0.0, %v425
        %427 = vmatprep.mubr.f32.mxu0 %v264
        %428 = vmatmul.mubr.f32.gmra.mrb[0].mxu0 %v263
        %v429 = vpop.f32.mrb[0].mxu0
        %v430 = vadd.f32 0.0, %v429
        %v431 = vpop.f32.mrb[0].mxu0
        %v432 = vadd.f32 0.0, %v431
        %433 = vmatprep.mubr.f32.mxu0 %v266
        %434 = vmatmul.mubr.f32.gmra.mrb[0].mxu0 %v265
        %v435 = vpop.f32.mrb[0].mxu0
        %v436 = vadd.f32 0.0, %v435
        %v437 = vpop.f32.mrb[0].mxu0
        %v438 = vadd.f32 0.0, %v437
        %439 = vmatprep.mubr.f32.mxu0 %v268
        %440 = vmatmul.mubr.f32.gmra.mrb[0].mxu0 %v267
        %v441 = vpop.f32.mrb[0].mxu0
        %v442 = vadd.f32 0.0, %v441
        %v443 = vpop.f32.mrb[0].mxu0
        %v444 = vadd.f32 0.0, %v443
        %445 = vmatprep.mubr.f32.mxu0 %v270
        %446 = vmatmul.mubr.f32.gmra.mrb[0].mxu0 %v269
        %v447 = vpop.f32.mrb[0].mxu0
        %v448 = vadd.f32 0.0, %v447
        %v449 = vpop.f32.mrb[0].mxu0
        %v450 = vadd.f32 0.0, %v449
        %451 = vmatprep.mubr.f32.mxu0 %v272
        %452 = vmatmul.mubr.f32.gmra.mrb[0].mxu0 %v271
        %v453 = vpop.f32.mrb[0].mxu0
        %v454 = vadd.f32 0.0, %v453
        %v455 = vpop.f32.mrb[0].mxu0
        %v456 = vadd.f32 0.0, %v455
        %457 = vmatprep.mubr.f32.mxu0 %v274
        %458 = vmatmul.mubr.f32.gmra.mrb[0].mxu0 %v273
        %v459 = vpop.f32.mrb[0].mxu0
        %v460 = vadd.f32 0.0, %v459
        %v461 = vpop.f32.mrb[0].mxu0
        %v462 = vadd.f32 0.0, %v461
        %463 = vmatprep.mubr.f32.mxu0 %v276
        %464 = vmatmul.mubr.f32.gmra.mrb[0].mxu0 %v275
        %v465 = vpop.f32.mrb[0].mxu0
        %v466 = vadd.f32 0.0, %v465
        %v467 = vpop.f32.mrb[0].mxu0
        %v468 = vadd.f32 0.0, %v467
        %469 = vmatprep.mubr.f32.mxu0 %v278
        %470 = vmatmul.mubr.f32.gmra.mrb[0].mxu0 %v277
        %v471 = vpop.f32.mrb[0].mxu0
        %v472 = vadd.f32 0.0, %v471
        %v473 = vpop.f32.mrb[0].mxu0
        %v474 = vadd.f32 0.0, %v473
        %475 = vmatprep.mubr.f32.mxu0 %v280
        %476 = vmatmul.mubr.f32.gmra.mrb[0].mxu0 %v279
        %v477 = vpop.f32.mrb[0].mxu0
        %v478 = vadd.f32 0.0, %v477
        %v479 = vpop.f32.mrb[0].mxu0
        %v480 = vadd.f32 0.0, %v479
        %481 = vmatprep.mubr.f32.mxu0 %v282
        %482 = vmatmul.mubr.f32.gmra.mrb[0].mxu0 %v281
        %v483 = vpop.f32.mrb[0].mxu0
        %v484 = vadd.f32 0.0, %v483
        %v485 = vpop.f32.mrb[0].mxu0
        %v486 = vadd.f32 0.0, %v485
        %487 = vmatprep.mubr.f32.mxu0 %v284
        %488 = vmatmul.mubr.f32.gmra.mrb[0].mxu0 %v283
        %v489 = vpop.f32.mrb[0].mxu0
        %v490 = vadd.f32 0.0, %v489
        %v491 = vpop.f32.mrb[0].mxu0
        %v492 = vadd.f32 0.0, %v491
        %493 = vmatprep.mubr.f32.mxu0 %v286
        %494 = vmatmul.mubr.f32.gmra.mrb[0].mxu0 %v285
        %v495 = vpop.f32.mrb[0].mxu0
        %v496 = vadd.f32 0.0, %v495
        %v497 = vpop.f32.mrb[0].mxu0
        %v498 = vadd.f32 0.0, %v497
        %499 = vmatprep.mubr.f32.mxu0 %v288
        %500 = vmatmul.mubr.f32.gmra.mrb[0].mxu0 %v287
        %v501 = vpop.f32.mrb[0].mxu0
        %v502 = vadd.f32 0.0, %v501
        %v503 = vpop.f32.mrb[0].mxu0
        %v504 = vadd.f32 0.0, %v503
        %505 = vmatprep.mubr.f32.mxu0 %v290
        %506 = vmatmul.mubr.f32.gmra.mrb[0].mxu0 %v289
        %v507 = vpop.f32.mrb[0].mxu0
        %v508 = vadd.f32 0.0, %v507
        %v509 = vpop.f32.mrb[0].mxu0
        %v510 = vadd.f32 0.0, %v509
        %511 = vmatprep.mubr.f32.mxu0 %v292
        %512 = vmatmul.mubr.f32.gmra.mrb[0].mxu0 %v291
        %v513 = vpop.f32.mrb[0].mxu0
        %v514 = vadd.f32 0.0, %v513
        %v515 = vpop.f32.mrb[0].mxu0
        %v516 = vadd.f32 0.0, %v515
        %517 = vdwg.mxu0
        %v518 = vadd.f32 %v424, %v426
        %519 = vadd.xlane.f32.xlu0 %v518
        %v520 = vpop.xlane.xlu0 %519
        %v521 = vadd.f32 %v430, %v432
        %522 = vadd.xlane.f32.xlu0 %v521
        %v523 = vpop.xlane.xlu0 %522
        %v524 = vadd.f32 %v436, %v438
        %525 = vadd.xlane.f32.xlu0 %v524
        %v526 = vpop.xlane.xlu0 %525
        %v527 = vadd.f32 %v442, %v444
        %528 = vadd.xlane.f32.xlu0 %v527
        %v529 = vpop.xlane.xlu0 %528
        %v530 = vadd.f32 %v448, %v450
        %531 = vadd.xlane.f32.xlu0 %v530
        %v532 = vpop.xlane.xlu0 %531
        %v533 = vadd.f32 %v454, %v456
        %534 = vadd.xlane.f32.xlu0 %v533
        %v535 = vpop.xlane.xlu0 %534
        %v536 = vadd.f32 %v460, %v462
        %537 = vadd.xlane.f32.xlu0 %v536
        %v538 = vpop.xlane.xlu0 %537
        %v539 = vadd.f32 %v466, %v468
        %540 = vadd.xlane.f32.xlu0 %v539
        %v541 = vpop.xlane.xlu0 %540
        %v542 = vadd.f32 %v472, %v474
        %543 = vadd.xlane.f32.xlu0 %v542
        %v544 = vpop.xlane.xlu0 %543
        %v545 = vadd.f32 %v478, %v480
        %546 = vadd.xlane.f32.xlu0 %v545
        %v547 = vpop.xlane.xlu0 %546
        %v548 = vadd.f32 %v484, %v486
        %549 = vadd.xlane.f32.xlu0 %v548
        %v550 = vpop.xlane.xlu0 %549
        %v551 = vadd.f32 %v490, %v492
        %552 = vadd.xlane.f32.xlu0 %v551
        %v553 = vpop.xlane.xlu0 %552
        %v554 = vadd.f32 %v496, %v498
        %555 = vadd.xlane.f32.xlu0 %v554
        %v556 = vpop.xlane.xlu0 %555
        %v557 = vadd.f32 %v502, %v504
        %558 = vadd.xlane.f32.xlu0 %v557
        %v559 = vpop.xlane.xlu0 %558
        %v560 = vadd.f32 %v508, %v510
        %561 = vadd.xlane.f32.xlu0 %v560
        %v562 = vpop.xlane.xlu0 %561
        %v563 = vadd.f32 %v514, %v516
        %564 = vadd.xlane.f32.xlu0 %v563
        %v565 = vpop.xlane.xlu0 %564
        %v566 = vmul.f32 %v424, %v424
        %v567 = vmul.f32 %v426, %v426
        %v568 = vmul.f32 %v430, %v430
        %v569 = vmul.f32 %v432, %v432
        %v570 = vmul.f32 %v436, %v436
        %v571 = vmul.f32 %v438, %v438
        %v572 = vmul.f32 %v442, %v442
        %v573 = vmul.f32 %v444, %v444
        %v574 = vmul.f32 %v448, %v448
        %v575 = vmul.f32 %v450, %v450
        %v576 = vmul.f32 %v454, %v454
        %v577 = vmul.f32 %v456, %v456
        %v578 = vmul.f32 %v460, %v460
        %v579 = vmul.f32 %v462, %v462
        %v580 = vmul.f32 %v466, %v466
        %v581 = vmul.f32 %v468, %v468
        %v582 = vmul.f32 %v472, %v472
        %v583 = vmul.f32 %v474, %v474
        %v584 = vmul.f32 %v478, %v478
        %v585 = vmul.f32 %v480, %v480
        %v586 = vmul.f32 %v484, %v484
        %v587 = vmul.f32 %v486, %v486
        %v588 = vmul.f32 %v490, %v490
        %v589 = vmul.f32 %v492, %v492
        %v590 = vmul.f32 %v496, %v496
        %v591 = vmul.f32 %v498, %v498
        %v592 = vmul.f32 %v502, %v502
        %v593 = vmul.f32 %v504, %v504
        %v594 = vmul.f32 %v508, %v508
        %v595 = vmul.f32 %v510, %v510
        %v596 = vmul.f32 %v514, %v514
        %v597 = vmul.f32 %v516, %v516
        %v598 = vadd.f32 %v566, %v567
        %599 = vadd.xlane.f32.xlu0 %v598
        %v600 = vpop.xlane.xlu0 %599
        %v601 = vadd.f32 %v568, %v569
        %602 = vadd.xlane.f32.xlu0 %v601
        %v603 = vpop.xlane.xlu0 %602
        %v604 = vadd.f32 %v570, %v571
        %605 = vadd.xlane.f32.xlu0 %v604
        %v606 = vpop.xlane.xlu0 %605
        %v607 = vadd.f32 %v572, %v573
        %608 = vadd.xlane.f32.xlu0 %v607
        %v609 = vpop.xlane.xlu0 %608
        %v610 = vadd.f32 %v574, %v575
        %611 = vadd.xlane.f32.xlu0 %v610
        %v612 = vpop.xlane.xlu0 %611
        %v613 = vadd.f32 %v576, %v577
        %614 = vadd.xlane.f32.xlu0 %v613
        %v615 = vpop.xlane.xlu0 %614
        %v616 = vadd.f32 %v578, %v579
        %617 = vadd.xlane.f32.xlu0 %v616
        %v618 = vpop.xlane.xlu0 %617
        %v619 = vadd.f32 %v580, %v581
        %620 = vadd.xlane.f32.xlu0 %v619
        %v621 = vpop.xlane.xlu0 %620
        %v622 = vadd.f32 %v582, %v583
        %623 = vadd.xlane.f32.xlu0 %v622
        %v624 = vpop.xlane.xlu0 %623
        %v625 = vadd.f32 %v584, %v585
        %626 = vadd.xlane.f32.xlu0 %v625
        %v627 = vpop.xlane.xlu0 %626
        %v628 = vadd.f32 %v586, %v587
        %629 = vadd.xlane.f32.xlu0 %v628
        %v630 = vpop.xlane.xlu0 %629
        %v631 = vadd.f32 %v588, %v589
        %632 = vadd.xlane.f32.xlu0 %v631
        %v633 = vpop.xlane.xlu0 %632
        %v634 = vadd.f32 %v590, %v591
        %635 = vadd.xlane.f32.xlu0 %v634
        %v636 = vpop.xlane.xlu0 %635
        %v637 = vadd.f32 %v592, %v593
        %638 = vadd.xlane.f32.xlu0 %v637
        %v639 = vpop.xlane.xlu0 %638
        %v640 = vadd.f32 %v594, %v595
        %641 = vadd.xlane.f32.xlu0 %v640
        %v642 = vpop.xlane.xlu0 %641
        %v643 = vadd.f32 %v596, %v597
        %644 = vadd.xlane.f32.xlu0 %v643
        %v645 = vpop.xlane.xlu0 %644
        %v646 = vmul.f32 %v520, 0.0051020407
        %v647 = vmul.f32 %v523, 0.0051020407
        %v648 = vmul.f32 %v526, 0.0051020407
        %v649 = vmul.f32 %v529, 0.0051020407
        %v650 = vmul.f32 %v532, 0.0051020407
        %v651 = vmul.f32 %v535, 0.0051020407
        %v652 = vmul.f32 %v538, 0.0051020407
        %v653 = vmul.f32 %v541, 0.0051020407
        %v654 = vmul.f32 %v544, 0.0051020407
        %v655 = vmul.f32 %v547, 0.0051020407
        %v656 = vmul.f32 %v550, 0.0051020407
        %v657 = vmul.f32 %v553, 0.0051020407
        %v658 = vmul.f32 %v556, 0.0051020407
        %v659 = vmul.f32 %v559, 0.0051020407
        %v660 = vmul.f32 %v562, 0.0051020407
        %v661 = vmul.f32 %v565, 0.0051020407
        %v662 = vmul.f32 %v600, 0.0051020407
        %v663 = vmul.f32 %v603, 0.0051020407
        %v664 = vmul.f32 %v606, 0.0051020407
        %v665 = vmul.f32 %v609, 0.0051020407
        %v666 = vmul.f32 %v612, 0.0051020407
        %v667 = vmul.f32 %v615, 0.0051020407
        %v668 = vmul.f32 %v618, 0.0051020407
        %v669 = vmul.f32 %v621, 0.0051020407
        %v670 = vmul.f32 %v624, 0.0051020407
        %v671 = vmul.f32 %v627, 0.0051020407
        %v672 = vmul.f32 %v630, 0.0051020407
        %v673 = vmul.f32 %v633, 0.0051020407
        %v674 = vmul.f32 %v636, 0.0051020407
        %v675 = vmul.f32 %v639, 0.0051020407
        %v676 = vmul.f32 %v642, 0.0051020407
        %v677 = vmul.f32 %v645, 0.0051020407
        %v678 = vmul.f32 %v646, %v646
        %v679 = vmul.f32 %v647, %v647
        %v680 = vmul.f32 %v648, %v648
        %v681 = vmul.f32 %v649, %v649
        %v682 = vmul.f32 %v650, %v650
        %v683 = vmul.f32 %v651, %v651
        %v684 = vmul.f32 %v652, %v652
        %v685 = vmul.f32 %v653, %v653
        %v686 = vmul.f32 %v654, %v654
        %v687 = vmul.f32 %v655, %v655
        %v688 = vmul.f32 %v656, %v656
        %v689 = vmul.f32 %v657, %v657
        %v690 = vmul.f32 %v658, %v658
        %v691 = vmul.f32 %v659, %v659
        %v692 = vmul.f32 %v660, %v660
        %v693 = vmul.f32 %v661, %v661
        %v694 = vsub.f32 %v662, %v678
        %v695 = vsub.f32 %v663, %v679
        %v696 = vsub.f32 %v664, %v680
        %v697 = vsub.f32 %v665, %v681
        %v698 = vsub.f32 %v666, %v682
        %v699 = vsub.f32 %v667, %v683
        %v700 = vsub.f32 %v668, %v684
        %v701 = vsub.f32 %v669, %v685
        %v702 = vsub.f32 %v670, %v686
        %v703 = vsub.f32 %v671, %v687
        %v704 = vsub.f32 %v672, %v688
        %v705 = vsub.f32 %v673, %v689
        %v706 = vsub.f32 %v674, %v690
        %v707 = vsub.f32 %v675, %v691
        %v708 = vsub.f32 %v676, %v692
        %v709 = vsub.f32 %v677, %v693
        %v710 = vadd.f32 %v694, 1e-05
        %v711 = vadd.f32 %v695, 1e-05
        %v712 = vadd.f32 %v696, 1e-05
        %v713 = vadd.f32 %v697, 1e-05
        %v714 = vadd.f32 %v698, 1e-05
        %v715 = vadd.f32 %v699, 1e-05
        %v716 = vadd.f32 %v700, 1e-05
        %v717 = vadd.f32 %v701, 1e-05
        %v718 = vadd.f32 %v702, 1e-05
        %v719 = vadd.f32 %v703, 1e-05
        %v720 = vadd.f32 %v704, 1e-05
        %v721 = vadd.f32 %v705, 1e-05
        %v722 = vadd.f32 %v706, 1e-05
        %v723 = vadd.f32 %v707, 1e-05
        %v724 = vadd.f32 %v708, 1e-05
        %v725 = vadd.f32 %v709, 1e-05
        %v726 = vrsqrt.pop %v710
        %v727 = vrsqrt.pop %v711
        %v728 = vrsqrt.pop %v712
        %v729 = vrsqrt.pop %v713
        %v730 = vrsqrt.pop %v714
        %v731 = vrsqrt.pop %v715
        %v732 = vrsqrt.pop %v716
        %v733 = vrsqrt.pop %v717
        %v734 = vrsqrt.pop %v718
        %v735 = vrsqrt.pop %v719
        %v736 = vrsqrt.pop %v720
        %v737 = vrsqrt.pop %v721
        %v738 = vrsqrt.pop %v722
        %v739 = vrsqrt.pop %v723
        %v740 = vrsqrt.pop %v724
        %v741 = vrsqrt.pop %v725
        %v742 = vld [vmem:[%s252] sm:$0xff]
        %v743 = vld [vmem:[%s252 + $0x8] sm:$0xff]
        %v744 = vld [vmem:[%s252 + $0x10] sm:$0xff]
        %v745 = vld [vmem:[%s252 + $0x18] sm:$0xff]
        %v746 = vld [vmem:[%s252 + $0x20] sm:$0xff]
        %v747 = vld [vmem:[%s252 + $0x28] sm:$0xff]
        %v748 = vld [vmem:[%s252 + $0x30] sm:$0xff]
        %v749 = vld [vmem:[%s252 + $0x38] sm:$0xff]
        %v750 = vld [vmem:[%s252 + $0x40] sm:$0xff]
        %v751 = vld [vmem:[%s252 + $0x48] sm:$0xff]
        %v752 = vld [vmem:[%s252 + $0x50] sm:$0xff]
        %v753 = vld [vmem:[%s252 + $0x58] sm:$0xff]
        %v754 = vld [vmem:[%s252 + $0x60] sm:$0xff]
        %v755 = vld [vmem:[%s252 + $0x68] sm:$0xff]
        %v756 = vld [vmem:[%s252 + $0x70] sm:$0xff]
        %v757 = vld [vmem:[%s252 + $0x78] sm:$0xff]
        %v758 = vmul.f32 %v742, %v726
        %v759 = vmul.f32 %v743, %v727
        %v760 = vmul.f32 %v744, %v728
        %v761 = vmul.f32 %v745, %v729
        %v762 = vmul.f32 %v746, %v730
        %v763 = vmul.f32 %v747, %v731
        %v764 = vmul.f32 %v748, %v732
        %v765 = vmul.f32 %v749, %v733
        %v766 = vmul.f32 %v750, %v734
        %v767 = vmul.f32 %v751, %v735
        %v768 = vmul.f32 %v752, %v736
        %v769 = vmul.f32 %v753, %v737
        %v770 = vmul.f32 %v754, %v738
        %v771 = vmul.f32 %v755, %v739
        %v772 = vmul.f32 %v756, %v740
        %v773 = vmul.f32 %v757, %v741
        %v774 = vld [vmem:[%s258] sm:$0xff]
        %v775 = vld [vmem:[%s258 + $0x8] sm:$0xff]
        %v776 = vld [vmem:[%s258 + $0x10] sm:$0xff]
        %v777 = vld [vmem:[%s258 + $0x18] sm:$0xff]
        %v778 = vld [vmem:[%s258 + $0x20] sm:$0xff]
        %v779 = vld [vmem:[%s258 + $0x28] sm:$0xff]
        %v780 = vld [vmem:[%s258 + $0x30] sm:$0xff]
        %v781 = vld [vmem:[%s258 + $0x38] sm:$0xff]
        %v782 = vld [vmem:[%s258 + $0x40] sm:$0xff]
        %v783 = vld [vmem:[%s258 + $0x48] sm:$0xff]
        %v784 = vld [vmem:[%s258 + $0x50] sm:$0xff]
        %v785 = vld [vmem:[%s258 + $0x58] sm:$0xff]
        %v786 = vld [vmem:[%s258 + $0x60] sm:$0xff]
        %v787 = vld [vmem:[%s258 + $0x68] sm:$0xff]
        %v788 = vld [vmem:[%s258 + $0x70] sm:$0xff]
        %v789 = vld [vmem:[%s258 + $0x78] sm:$0xff]
        %v790 = vmul.f32 %v646, %v758
        %v791 = vmul.f32 %v647, %v759
        %v792 = vmul.f32 %v648, %v760
        %v793 = vmul.f32 %v649, %v761
        %v794 = vmul.f32 %v650, %v762
        %v795 = vmul.f32 %v651, %v763
        %v796 = vmul.f32 %v652, %v764
        %v797 = vmul.f32 %v653, %v765
        %v798 = vmul.f32 %v654, %v766
        %v799 = vmul.f32 %v655, %v767
        %v800 = vmul.f32 %v656, %v768
        %v801 = vmul.f32 %v657, %v769
        %v802 = vmul.f32 %v658, %v770
        %v803 = vmul.f32 %v659, %v771
        %v804 = vmul.f32 %v660, %v772
        %v805 = vmul.f32 %v661, %v773
        %v806 = vsub.f32 %v774, %v790
        %v807 = vsub.f32 %v775, %v791
        %v808 = vsub.f32 %v776, %v792
        %v809 = vsub.f32 %v777, %v793
        %v810 = vsub.f32 %v778, %v794
        %v811 = vsub.f32 %v779, %v795
        %v812 = vsub.f32 %v780, %v796
        %v813 = vsub.f32 %v781, %v797
        %v814 = vsub.f32 %v782, %v798
        %v815 = vsub.f32 %v783, %v799
        %v816 = vsub.f32 %v784, %v800
        %v817 = vsub.f32 %v785, %v801
        %v818 = vsub.f32 %v786, %v802
        %v819 = vsub.f32 %v787, %v803
        %v820 = vsub.f32 %v788, %v804
        %v821 = vsub.f32 %v789, %v805
        %823 = vset.pattern.permute.xlu0 0
        %824 = vperm.xlu0 %823, %v758
        %v825 = vpop.permute.xlu0 %824
        %828 = vset.pattern.permute.xlu0 0
        %829 = vperm.xlu0 %828, %v759
        %v830 = vpop.permute.xlu0 %829
        %833 = vset.pattern.permute.xlu0 0
        %834 = vperm.xlu0 %833, %v760
        %v835 = vpop.permute.xlu0 %834
        %838 = vset.pattern.permute.xlu0 0
        %839 = vperm.xlu0 %838, %v761
        %v840 = vpop.permute.xlu0 %839
        %843 = vset.pattern.permute.xlu0 0
        %844 = vperm.xlu0 %843, %v762
        %v845 = vpop.permute.xlu0 %844
        %848 = vset.pattern.permute.xlu0 0
        %849 = vperm.xlu0 %848, %v763
        %v850 = vpop.permute.xlu0 %849
        %853 = vset.pattern.permute.xlu0 0
        %854 = vperm.xlu0 %853, %v764
        %v855 = vpop.permute.xlu0 %854
        %858 = vset.pattern.permute.xlu0 0
        %859 = vperm.xlu0 %858, %v765
        %v860 = vpop.permute.xlu0 %859
        %863 = vset.pattern.permute.xlu0 0
        %864 = vperm.xlu0 %863, %v766
        %v865 = vpop.permute.xlu0 %864
        %868 = vset.pattern.permute.xlu0 0
        %869 = vperm.xlu0 %868, %v767
        %v870 = vpop.permute.xlu0 %869
        %873 = vset.pattern.permute.xlu0 0
        %874 = vperm.xlu0 %873, %v768
        %v875 = vpop.permute.xlu0 %874
        %878 = vset.pattern.permute.xlu0 0
        %879 = vperm.xlu0 %878, %v769
        %v880 = vpop.permute.xlu0 %879
        %883 = vset.pattern.permute.xlu0 0
        %884 = vperm.xlu0 %883, %v770
        %v885 = vpop.permute.xlu0 %884
        %888 = vset.pattern.permute.xlu0 0
        %889 = vperm.xlu0 %888, %v771
        %v890 = vpop.permute.xlu0 %889
        %893 = vset.pattern.permute.xlu0 0
        %894 = vperm.xlu0 %893, %v772
        %v895 = vpop.permute.xlu0 %894
        %898 = vset.pattern.permute.xlu0 0
        %899 = vperm.xlu0 %898, %v773
        %v900 = vpop.permute.xlu0 %899
        %v902 = vmul.f32 %v424, %v825
        %v903 = vmul.f32 %v426, %v825
        %v904 = vmul.f32 %v430, %v830
        %v905 = vmul.f32 %v432, %v830
        %v906 = vmul.f32 %v436, %v835
        %v907 = vmul.f32 %v438, %v835
        %v908 = vmul.f32 %v442, %v840
        %v909 = vmul.f32 %v444, %v840
        %v910 = vmul.f32 %v448, %v845
        %v911 = vmul.f32 %v450, %v845
        %v912 = vmul.f32 %v454, %v850
        %v913 = vmul.f32 %v456, %v850
        %v914 = vmul.f32 %v460, %v855
        %v915 = vmul.f32 %v462, %v855
        %v916 = vmul.f32 %v466, %v860
        %v917 = vmul.f32 %v468, %v860
        %v918 = vmul.f32 %v472, %v865
        %v919 = vmul.f32 %v474, %v865
        %v920 = vmul.f32 %v478, %v870
        %v921 = vmul.f32 %v480, %v870
        %v922 = vmul.f32 %v484, %v875
        %v923 = vmul.f32 %v486, %v875
        %v924 = vmul.f32 %v490, %v880
        %v925 = vmul.f32 %v492, %v880
        %v926 = vmul.f32 %v496, %v885
        %v927 = vmul.f32 %v498, %v885
        %v928 = vmul.f32 %v502, %v890
        %v929 = vmul.f32 %v504, %v890
        %v930 = vmul.f32 %v508, %v895
        %v931 = vmul.f32 %v510, %v895
        %v932 = vmul.f32 %v514, %v900
        %v933 = vmul.f32 %v516, %v900
        %935 = vset.pattern.permute.xlu0 0
        %936 = vperm.xlu0 %935, %v806
        %v937 = vpop.permute.xlu0 %936
        %940 = vset.pattern.permute.xlu0 0
        %941 = vperm.xlu0 %940, %v807
        %v942 = vpop.permute.xlu0 %941
        %945 = vset.pattern.permute.xlu0 0
        %946 = vperm.xlu0 %945, %v808
        %v947 = vpop.permute.xlu0 %946
        %950 = vset.pattern.permute.xlu0 0
        %951 = vperm.xlu0 %950, %v809
        %v952 = vpop.permute.xlu0 %951
        %955 = vset.pattern.permute.xlu0 0
        %956 = vperm.xlu0 %955, %v810
        %v957 = vpop.permute.xlu0 %956
        %960 = vset.pattern.permute.xlu0 0
        %961 = vperm.xlu0 %960, %v811
        %v962 = vpop.permute.xlu0 %961
        %965 = vset.pattern.permute.xlu0 0
        %966 = vperm.xlu0 %965, %v812
        %v967 = vpop.permute.xlu0 %966
        %970 = vset.pattern.permute.xlu0 0
        %971 = vperm.xlu0 %970, %v813
        %v972 = vpop.permute.xlu0 %971
        %975 = vset.pattern.permute.xlu0 0
        %976 = vperm.xlu0 %975, %v814
        %v977 = vpop.permute.xlu0 %976
        %980 = vset.pattern.permute.xlu0 0
        %981 = vperm.xlu0 %980, %v815
        %v982 = vpop.permute.xlu0 %981
        %985 = vset.pattern.permute.xlu0 0
        %986 = vperm.xlu0 %985, %v816
        %v987 = vpop.permute.xlu0 %986
        %990 = vset.pattern.permute.xlu0 0
        %991 = vperm.xlu0 %990, %v817
        %v992 = vpop.permute.xlu0 %991
        %995 = vset.pattern.permute.xlu0 0
        %996 = vperm.xlu0 %995, %v818
        %v997 = vpop.permute.xlu0 %996
        %1000 = vset.pattern.permute.xlu0 0
        %1001 = vperm.xlu0 %1000, %v819
        %v1002 = vpop.permute.xlu0 %1001
        %1005 = vset.pattern.permute.xlu0 0
        %1006 = vperm.xlu0 %1005, %v820
        %v1007 = vpop.permute.xlu0 %1006
        %1010 = vset.pattern.permute.xlu0 0
        %1011 = vperm.xlu0 %1010, %v821
        %v1012 = vpop.permute.xlu0 %1011
        %v1014 = vadd.f32 %v902, %v937
        %v1015 = vadd.f32 %v903, %v937
        %v1016 = vadd.f32 %v904, %v942
        %v1017 = vadd.f32 %v905, %v942
        %v1018 = vadd.f32 %v906, %v947
        %v1019 = vadd.f32 %v907, %v947
        %v1020 = vadd.f32 %v908, %v952
        %v1021 = vadd.f32 %v909, %v952
        %v1022 = vadd.f32 %v910, %v957
        %v1023 = vadd.f32 %v911, %v957
        %v1024 = vadd.f32 %v912, %v962
        %v1025 = vadd.f32 %v913, %v962
        %v1026 = vadd.f32 %v914, %v967
        %v1027 = vadd.f32 %v915, %v967
        %v1028 = vadd.f32 %v916, %v972
        %v1029 = vadd.f32 %v917, %v972
        %v1030 = vadd.f32 %v918, %v977
        %v1031 = vadd.f32 %v919, %v977
        %v1032 = vadd.f32 %v920, %v982
        %v1033 = vadd.f32 %v921, %v982
        %v1034 = vadd.f32 %v922, %v987
        %v1035 = vadd.f32 %v923, %v987
        %v1036 = vadd.f32 %v924, %v992
        %v1037 = vadd.f32 %v925, %v992
        %v1038 = vadd.f32 %v926, %v997
        %v1039 = vadd.f32 %v927, %v997
        %v1040 = vadd.f32 %v928, %v1002
        %v1041 = vadd.f32 %v929, %v1002
        %v1042 = vadd.f32 %v930, %v1007
        %v1043 = vadd.f32 %v931, %v1007
        %v1044 = vadd.f32 %v932, %v1012
        %v1045 = vadd.f32 %v933, %v1012
        %v1046 = vmax.f32 %v1014, 0.0
        %v1047 = vmax.f32 %v1015, 0.0
        %v1048 = vmax.f32 %v1016, 0.0
        %v1049 = vmax.f32 %v1017, 0.0
        %v1050 = vmax.f32 %v1018, 0.0
        %v1051 = vmax.f32 %v1019, 0.0
        %v1052 = vmax.f32 %v1020, 0.0
        %v1053 = vmax.f32 %v1021, 0.0
        %v1054 = vmax.f32 %v1022, 0.0
        %v1055 = vmax.f32 %v1023, 0.0
        %v1056 = vmax.f32 %v1024, 0.0
        %v1057 = vmax.f32 %v1025, 0.0
        %v1058 = vmax.f32 %v1026, 0.0
        %v1059 = vmax.f32 %v1027, 0.0
        %v1060 = vmax.f32 %v1028, 0.0
        %v1061 = vmax.f32 %v1029, 0.0
        %v1062 = vmax.f32 %v1030, 0.0
        %v1063 = vmax.f32 %v1031, 0.0
        %v1064 = vmax.f32 %v1032, 0.0
        %v1065 = vmax.f32 %v1033, 0.0
        %v1066 = vmax.f32 %v1034, 0.0
        %v1067 = vmax.f32 %v1035, 0.0
        %v1068 = vmax.f32 %v1036, 0.0
        %v1069 = vmax.f32 %v1037, 0.0
        %v1070 = vmax.f32 %v1038, 0.0
        %v1071 = vmax.f32 %v1039, 0.0
        %v1072 = vmax.f32 %v1040, 0.0
        %v1073 = vmax.f32 %v1041, 0.0
        %v1074 = vmax.f32 %v1042, 0.0
        %v1075 = vmax.f32 %v1043, 0.0
        %v1076 = vmax.f32 %v1044, 0.0
        %v1077 = vmax.f32 %v1045, 0.0
        %1078 = vst [vmem:[%s240] sm:$0xff] %v1046
        %1079 = vst [vmem:[%s240 + $0x8] sm:$0xff] %v1047
        %1080 = vst [vmem:[%s240 + $0x10] sm:$0xff] %v1048
        %1081 = vst [vmem:[%s240 + $0x18] sm:$0xff] %v1049
        %1082 = vst [vmem:[%s240 + $0x20] sm:$0xff] %v1050
        %1083 = vst [vmem:[%s240 + $0x28] sm:$0xff] %v1051
        %1084 = vst [vmem:[%s240 + $0x30] sm:$0xff] %v1052
        %1085 = vst [vmem:[%s240 + $0x38] sm:$0xff] %v1053
        %1086 = vst [vmem:[%s240 + $0x40] sm:$0xff] %v1054
        %1087 = vst [vmem:[%s240 + $0x48] sm:$0xff] %v1055
        %1088 = vst [vmem:[%s240 + $0x50] sm:$0xff] %v1056
        %1089 = vst [vmem:[%s240 + $0x58] sm:$0xff] %v1057
        %1090 = vst [vmem:[%s240 + $0x60] sm:$0xff] %v1058
        %1091 = vst [vmem:[%s240 + $0x68] sm:$0xff] %v1059
        %1092 = vst [vmem:[%s240 + $0x70] sm:$0xff] %v1060
        %1093 = vst [vmem:[%s240 + $0x78] sm:$0xff] %v1061
        %1094 = vst [vmem:[%s240 + $0x80] sm:$0xff] %v1062
        %1095 = vst [vmem:[%s240 + $0x88] sm:$0xff] %v1063
        %1096 = vst [vmem:[%s240 + $0x90] sm:$0xff] %v1064
        %1097 = vst [vmem:[%s240 + $0x98] sm:$0xff] %v1065
        %1098 = vst [vmem:[%s240 + $0xa0] sm:$0xff] %v1066
        %1099 = vst [vmem:[%s240 + $0xa8] sm:$0xff] %v1067
        %1100 = vst [vmem:[%s240 + $0xb0] sm:$0xff] %v1068
        %1101 = vst [vmem:[%s240 + $0xb8] sm:$0xff] %v1069
        %1102 = vst [vmem:[%s240 + $0xc0] sm:$0xff] %v1070
        %1103 = vst [vmem:[%s240 + $0xc8] sm:$0xff] %v1071
        %1104 = vst [vmem:[%s240 + $0xd0] sm:$0xff] %v1072
        %1105 = vst [vmem:[%s240 + $0xd8] sm:$0xff] %v1073
        %1106 = vst [vmem:[%s240 + $0xe0] sm:$0xff] %v1074
        %1107 = vst [vmem:[%s240 + $0xe8] sm:$0xff] %v1075
        %1108 = vst [vmem:[%s240 + $0xf0] sm:$0xff] %v1076
        %1109 = vst [vmem:[%s240 + $0xf8] sm:$0xff] %v1077
        %s1110 = sand.u32 %s126, 1
        %s1111 = scalar_lea.sflag [#allocation4], %s1110
        %s1112 = sand.u32 %s126, 1
        %s1113 = smul.addr %s1112, 256
        %s1114 = scalar_lea.vmem [#allocation5], %s1113
        // Predicated region
        $region41: #{tpu_custom_call.1} parent=35 // pred_check
          %p1115 = pneg %p136
        $region42: #{tpu_custom_call.1} parent=35 // pred_check_branch
          %1117 = sbr.rel (%p1115) target = $region44
        $region43: #{tpu_custom_call.1} parent=35 // pred_region
          %s1118 = smul.u32 16, %s19
          %s1120 = ssub.s32 4096, 4096
          %1121 = vsyncadd %s1111, %s1120
          %s1122 = smul.addr %s1118, 2
          %s1123 = smul.addr %s1122, 128
          %s1124 = scalar_lea.hbm %s4, %s1123
          %s1125 = sshll.u32 %s1114, 4
          %s1126 = int_to_ptr.vmem [resolvable:$true] %s1125
          %1131 = dma.vmem_to_hbm [thread:$0]  %s1126, 4096, %s1124, %s1111, 256, 256, 16
        $region44: #{tpu_custom_call.1} parent=35 // pred_fallthru
          _
      $region36: #{tpu_custom_call.1} parent=5 // pred_fallthru
        _
      %p1132 = scmp.le.s32.totalorder 2, %s14
      // Predicated region
      $region45: #{tpu_custom_call.1} parent=5 // pred_check
        %p1133 = pneg %p1132
      $region46: #{tpu_custom_call.1} parent=5 // pred_check_branch
        %1135 = sbr.rel (%p1133) target = $region48
      $region47: #{tpu_custom_call.1} parent=5 // pred_region
        %s1136 = ssub.s32 %s14, 2
        // Predicated region
        $region49: #{tpu_custom_call.1} parent=47 // pred_check
          %p1137 = pneg %p142
        $region50: #{tpu_custom_call.1} parent=47 // pred_check_branch
          %1139 = sbr.rel (%p1137) target = $region52
        $region51: #{tpu_custom_call.1} parent=47 // pred_region
          %s1140 = sand.u32 %s127, 1
          %s1141 = scalar_lea.sflag [#allocation4], %s1140
          %s1142 = sand.u32 %s127, 1
          %s1143 = smul.addr %s1142, 256
          %s1144 = scalar_lea.vmem [#allocation5], %s1143
          %1145 = dma.done %s1141, 4096
        $region52: #{tpu_custom_call.1} parent=47 // pred_fallthru
          _
      $region48: #{tpu_custom_call.1} parent=5 // pred_fallthru
        _
    $region6: #{tpu_custom_call.1} parent=1 // loop_footer
      %s18 = sadd.s32 1, %s14
    $region7: #{tpu_custom_call.1} parent=1 // loop_footer_branch
      %13 = sbr.rel target = $region3
    $region8: #{tpu_custom_call.1} parent=1 // loop_exit
      _
    %1146 = vsyncpa [#allocation3], 1
    %s1147 = scalar_lea.sflag [#allocation3], 1
    %1148 = vsyncpa %s1147, 1
    %1149 = vsyncpa [#allocation4], 1
    %s1150 = scalar_lea.sflag [#allocation4], 1
    %1151 = vsyncpa %s1150, 1

</llo_original>
